<compile_context>
chip_gen: v7x
topology: tpu7x:2x2x1
jax: 0.10.0
libtpu: 0.0.40
codegen_flags: <defaults>
</compile_context>

<pallas_src>
import functools
import math

import jax
import jax.numpy as jnp
from jax.experimental import pallas as pl
from jax.experimental.pallas import tpu as pltpu


# -----------------------------------------------------------------------------
# Kernel: expand the table from small precomputed sin/cos factor tables.
#
# Output row r (of the lane-dense 2-D slab) and lane l encode table element
# (position p, column c) with p = r*r_per + l//H, c = l % H, and value
# sin(p*d_c + phi_c), d_c = div_term[c//2], phi_c = pi/2 for odd c.
# Split r = chunk*R + r_fine:
#   A_coarse(chunk, l) = chunk*R*r_per*d_c
#   A_fine(r_fine, l)  = (r_fine*r_per + l//H)*d_c + phi_c
#   value = sinF*cosC + cosF*sinC        (exact identity, no drift)
# so the kernel does 2 mul + 1 add + 1 store per element and zero sin/cos.
# -----------------------------------------------------------------------------
def _pe_expand_kernel(sin_f_ref, cos_f_ref, sin_c_ref, cos_c_ref, o_ref, *,
                      num_chunks: int, chunk_rows: int):
    # sin_f/cos_f: (chunk_rows, W)  fine tables, same block every grid step
    # sin_c/cos_c: (num_chunks, W)  coarse rows for this tile's chunks
    # o_ref:       (num_chunks * chunk_rows, W) output tile
    for j in range(num_chunks):                       # static, small (<= 16)
        sc = sin_c_ref[pl.ds(j, 1), :]                # (1, W)
        cc = cos_c_ref[pl.ds(j, 1), :]                # (1, W)
        o_ref[pl.ds(j * chunk_rows, chunk_rows), :] = (
            sin_f_ref[...] * cc + cos_f_ref[...] * sc
        ).astype(o_ref.dtype)


def _plan_tiles(total_rows: int, lane_width: int):
    """Pick (fine_chunk_rows R, chunks_per_tile m, tile_rows, grid_steps)."""
    row_bytes = 4 * lane_width

    if total_rows <= 8:
        # single block equal to the full array (always a legal block shape)
        return total_rows, 1, total_rows, 1

    # Fine-table chunk: <= ~512 KiB, multiple of 8 sublanes.
    r = ((512 * 1024) // row_bytes) // 8 * 8
    r = max(8, min(r, (total_rows // 8) * 8))

    # Aim for up to 8 grid steps (keeps both v7x TensorCores busy and the
    # compute(i)/writeback(i-1) pipeline deep), but never shrink a step below
    # ~1 MiB so the ~0.35us per-step overhead stays amortized (v5e/v6e).
    total_bytes = total_rows * row_bytes
    want_steps = max(1, min(8, total_bytes // (1 << 20)))

    m_cap = max(1, (8 << 20) // (r * row_bytes))       # <= 8 MiB per output tile
    m = max(1, min(m_cap, -(-total_rows // (want_steps * r))))
    tile_rows = m * r
    grid = -(-total_rows // tile_rows)
    return r, m, tile_rows, grid


def _dense_table(seq_length: int, hidden_dim: int) -> jax.Array:
    """Pure-JAX fast path for tiny tables (launch overhead dominates Pallas)."""
    position = jnp.arange(seq_length, dtype=jnp.float32)[:, None]
    div_term = jnp.exp(jnp.arange(0, hidden_dim, 2, dtype=jnp.float32)
                       * (-math.log(10000.0) / hidden_dim))
    ang = position * div_term
    return jnp.stack([jnp.sin(ang), jnp.cos(ang)], axis=-1).reshape(
        1, seq_length, hidden_dim)


def sinusoidal_positional_embedding(seq_length: int, hidden_dim: int, *,
                                    dtype=jnp.float32,
                                    min_pallas_elements: int = 4096) -> jax.Array:
    """Returns the (1, seq_length, hidden_dim) sinusoidal positional table."""
    assert seq_length >= 1
    assert hidden_dim >= 2 and hidden_dim % 2 == 0, \
        "hidden_dim must be even (the PyTorch module's even/odd slicing requires it)"
    # f32 positions are exact only below 2**24; beyond that both this kernel and
    # any f32 reference table degrade identically.
    assert seq_length < (1 << 24)

    S, H = seq_length, hidden_dim

    # Tiny tables: a single-step pallas_call is dominated by launch/step
    # overhead; the XLA-fused elementwise formula is faster and simpler.
    if S * H < min_pallas_elements:
        return _dense_table(S, H).astype(dtype)

    # ---- output layout: lane-dense stores -----------------------------------
    if H >= 128:
        W, r_per = H, 1                 # H on lanes (>=128 -> unmasked stores)
    elif 128 % H == 0:
        W, r_per = 128, 128 // H        # pack 128//H consecutive positions/row
    else:
        W, r_per = H, 1                 # rare fallback: masked stores, correct
    total_rows = -(-S // r_per)         # ceil

    R, m, tile_rows, grid = _plan_tiles(total_rows, W)
    padded_rows = grid * tile_rows      # blocks divide the array exactly
    n_chunks = grid * m

    # ---- wrapper-side precompute: all transcendentals live here -------------
    lane = jnp.arange(W, dtype=jnp.int32)
    col = lane % H
    d = jnp.exp((2.0 * (col // 2).astype(jnp.float32))
                * (-math.log(10000.0) / H))                       # (W,)
    odd = (col % 2) == 1

    # fine part: per (row-in-chunk, lane) angle, phase applied via exact
    # identities (sin(a+pi/2)=cos a, cos(a+pi/2)=-sin a): no pi/2 rounding.
    p_fine = (jnp.arange(R, dtype=jnp.int32)[:, None] * r_per
              + (lane // H)[None, :]).astype(jnp.float32)          # (R, W)
    a_fine = p_fine * d[None, :]
    sin_f = jnp.where(odd[None, :], jnp.cos(a_fine), jnp.sin(a_fine))
    cos_f = jnp.where(odd[None, :], -jnp.sin(a_fine), jnp.cos(a_fine))

    # coarse part: per-chunk base-position angle
    base = (jnp.arange(n_chunks, dtype=jnp.int32) * (R * r_per)).astype(jnp.float32)
    a_coarse = base[:, None] * d[None, :]                          # (n_chunks, W)
    sin_c = jnp.sin(a_coarse)
    cos_c = jnp.cos(a_coarse)

    kernel = functools.partial(_pe_expand_kernel, num_chunks=m, chunk_rows=R)

    out = pl.pallas_call(
        kernel,
        out_shape=jax.ShapeDtypeStruct((1, padded_rows, W), dtype),
        grid=(grid,),
        in_specs=[
            pl.BlockSpec((R, W), lambda i: (0, 0)),   # sin_fine  (VMEM-resident)
            pl.BlockSpec((R, W), lambda i: (0, 0)),   # cos_fine  (VMEM-resident)
            pl.BlockSpec((m, W), lambda i: (i, 0)),   # sin_coarse rows of tile i
            pl.BlockSpec((m, W), lambda i: (i, 0)),   # cos_coarse rows of tile i
        ],
        # leading batch dim squeezed; keeps the (1, S, H) contract in-kernel
        out_specs=pl.BlockSpec((None, tile_rows, W), lambda i: (0, i, 0)),
        compiler_params=pltpu.CompilerParams(
            dimension_semantics=("parallel",),   # shard tiles across v7x's 2 TCs
            vmem_limit_bytes=28 << 20,           # 2x8MiB out + fine/coarse, all gens
        ),
    )(sin_f, cos_f, sin_c, cos_c)

    # ---- restore the exact (1, S, H) result ----------------------------------
    if W == H:
        return out if padded_rows == S else out[:, :S, :]
    flat = out.reshape(1, padded_rows * W)
    return flat[:, : S * H].reshape(1, S, H)


def _reference(seq_length: int, hidden_dim: int) -> jax.Array:
    """Pure-JAX mirror of the PyTorch __init__ (independent of the fast path)."""
    position = jnp.arange(seq_length, dtype=jnp.float32)[:, None]
    div_term = jnp.exp(jnp.arange(0, hidden_dim, 2, dtype=jnp.float32)
                       * (-math.log(10000.0) / hidden_dim))
    pe = jnp.zeros((1, seq_length, hidden_dim), dtype=jnp.float32)
    pe = pe.at[0, :, 0::2].set(jnp.sin(position * div_term))
    pe = pe.at[0, :, 1::2].set(jnp.cos(position * div_term))
    return pe


if __name__ == "__main__":
    key = jax.random.PRNGKey(0)  # determinism convention; forward() takes no tensors
    del key

    # (seq_length, hidden_dim, kwargs, atol)
    cases = [
        # tiny table -> pure-JAX fast path
        (8, 32, dict(), 1e-5),
        # same tiny shape forced through the Pallas packed (H<128) path
        (8, 32, dict(min_pallas_elements=0), 1e-5),
        # packed lane-dense path (H=64 -> 2 positions per 128-lane row)
        (256, 64, dict(), 1e-5),
        # H >= 128 path, direct (1, S, H) output
        (64, 256, dict(), 1e-5),
        # H<128 that does not divide 128 -> masked-store fallback + padded rows
        (257, 96, dict(), 1e-5),
        # multi-step grid (4 steps) + multi-chunk tiles; looser atol because at
        # |pos*div| ~ 1e3 rad a single f32 argument rounding is already ~3e-5,
        # and kernel/reference round those arguments slightly differently.
        (1024, 1024, dict(), 3e-4),
    ]
    for S, H, kw, atol in cases:
        out = jax.block_until_ready(sinusoidal_positional_embedding(S, H, **kw))
        ref = _reference(S, H)
        assert out.shape == (1, S, H), (S, H, out.shape)
        assert out.dtype == jnp.float32
        assert jnp.allclose(out, ref, atol=atol, rtol=1e-5), (
            S, H, float(jnp.max(jnp.abs(out - ref))))
    print("KERNEL_OK")
</pallas_src>

<mosaic_0001>
module attributes {stable_mosaic.version = 11 : i64} {
  func.func @_pe_expand_kernel(%arg0: i32, %arg1: memref<2x128xf32, #tpu.memory_space<vmem>>, %arg2: memref<2x128xf32, #tpu.memory_space<vmem>>, %arg3: memref<1x128xf32, #tpu.memory_space<vmem>>, %arg4: memref<1x128xf32, #tpu.memory_space<vmem>>, %arg5: memref<1x2x128xf32, #tpu.memory_space<vmem>>) attributes {dimension_semantics = [#tpu.dimension_semantics<parallel>], iteration_bounds = array<i64: 1>, scalar_prefetch = 0 : i64, scratch_operands = 0 : i64, tpu.core_type = #tpu.core_type<tc>, window_params = [{pipeline_mode = #tpu.pipeline_mode<synchronous>, transform_indices = @transform_0, window_bounds = array<i64: 2, 128>}, {pipeline_mode = #tpu.pipeline_mode<synchronous>, transform_indices = @transform_1, window_bounds = array<i64: 2, 128>}, {transform_indices = @transform_2, window_bounds = array<i64: 1, 128>}, {transform_indices = @transform_3, window_bounds = array<i64: 1, 128>}, {transform_indices = @transform_4, window_bounds = array<i64: 1, 2, 128>}]} {
    %c0 = arith.constant 0 : index
    %c0_0 = arith.constant 0 : index
    %0 = vector.load %arg3[%c0, %c0_0] : memref<1x128xf32, #tpu.memory_space<vmem>>, vector<1x128xf32>
    %c0_1 = arith.constant 0 : index
    %c0_2 = arith.constant 0 : index
    %1 = vector.load %arg4[%c0_1, %c0_2] : memref<1x128xf32, #tpu.memory_space<vmem>>, vector<1x128xf32>
    %c0_3 = arith.constant 0 : index
    %c0_4 = arith.constant 0 : index
    %2 = vector.load %arg1[%c0_3, %c0_4] : memref<2x128xf32, #tpu.memory_space<vmem>>, vector<2x128xf32>
    %3 = vector.broadcast %1 : vector<1x128xf32> to vector<2x128xf32>
    %4 = arith.mulf %2, %3 : vector<2x128xf32>
    %c0_5 = arith.constant 0 : index
    %c0_6 = arith.constant 0 : index
    %5 = vector.load %arg2[%c0_5, %c0_6] : memref<2x128xf32, #tpu.memory_space<vmem>>, vector<2x128xf32>
    %6 = vector.broadcast %0 : vector<1x128xf32> to vector<2x128xf32>
    %7 = arith.mulf %5, %6 : vector<2x128xf32>
    %8 = arith.addf %4, %7 : vector<2x128xf32>
    %c0_7 = arith.constant 0 : index
    %c0_8 = arith.constant 0 : index
    %c0_9 = arith.constant 0 : index
    %9 = vector.load %arg5[%c0_7, %c0_8, %c0_9] : memref<1x2x128xf32, #tpu.memory_space<vmem>>, vector<1x2x128xf32>
    %10 = vector.shape_cast %9 : vector<1x2x128xf32> to vector<2x128xf32>
    %11 = vector.shape_cast %8 : vector<2x128xf32> to vector<1x2x128xf32>
    tpu.vector_store %arg5[%c0_7, %c0_8, %c0_9], %11 {strides = array<i32>} : memref<1x2x128xf32, #tpu.memory_space<vmem>>, vector<1x2x128xf32>,
    return
  }
  func.func @transform_0(%arg0: i32) -> (i32, i32) {
    %c0_i32 = arith.constant 0 : i32
    %c0_i32_0 = arith.constant 0 : i32
    %c0_i32_1 = arith.constant 0 : i32
    return %c0_i32, %c0_i32_0 : i32, i32
  }
  func.func @transform_1(%arg0: i32) -> (i32, i32) {
    %c0_i32 = arith.constant 0 : i32
    %c0_i32_0 = arith.constant 0 : i32
    %c0_i32_1 = arith.constant 0 : i32
    return %c0_i32, %c0_i32_0 : i32, i32
  }
  func.func @transform_2(%arg0: i32) -> (i32, i32) {
    %c0_i32 = arith.constant 0 : i32
    %c0_i32_0 = arith.constant 0 : i32
    return %arg0, %c0_i32 : i32, i32
  }
  func.func @transform_3(%arg0: i32) -> (i32, i32) {
    %c0_i32 = arith.constant 0 : i32
    %c0_i32_0 = arith.constant 0 : i32
    return %arg0, %c0_i32 : i32, i32
  }
  func.func @transform_4(%arg0: i32) -> (i32, i32, i32) {
    %c0_i32 = arith.constant 0 : i32
    %c0_i32_0 = arith.constant 0 : i32
    %c0_i32_1 = arith.constant 0 : i32
    return %c0_i32, %arg0, %c0_i32_0 : i32, i32, i32
  }
}

</mosaic_0001>

<llo_original>
// kernel: tpu_custom_call.1
$region0: #{tpu_custom_call.1}
  #allocation0 [shape = 'u32[]', space=smem, size = 0x4, offset = 0x4, fixed_abs, tag = 'smem constant byte address 0x4 - core index']
  #allocation1 [shape = 'u32[144,128]{1,0:T(1,128)}', space=vmem, size = 0x12000, scoped, tag = 'internal scratch']
  %s0 = inlined_call_operand.hbm [shape: f32[2,128], index: 0, kind: input, shape index: {}]
  %s1 = inlined_call_operand.vmem [shape: f32[2,128], index: 1, kind: input, shape index: {}]
  %s2 = inlined_call_operand.vmem [shape: f32[1,128], index: 2, kind: input, shape index: {}]
  %s3 = inlined_call_operand.vmem [shape: f32[1,128], index: 3, kind: input, shape index: {}]
  %s4 = inlined_call_operand.hbm [shape: f32[1,2,128], index: 4, kind: output, shape index: {}]
  %s5 = sld [smem:[#allocation0]]
  $region30: #{tpu_custom_call.1} parent=0
    _
  %s7 = ssub.s32 1, %s5
  %s8 = scalar_select 0, %s7, %s5
  $region1: #{tpu_custom_call.1} parent=0
    #allocation2 [shape = 'u8[1024]{0}', space=vmem, size = 0x400, scoped, tag = 'input window, operand 0, single buffered']
    #allocation3 [shape = 's32[1]{0}', space=sflag, size = 0x4, scoped, tag = 'scoped memory for tpu_custom_call.1']
    #allocation4 [shape = 's32[1]{0}', space=sflag, size = 0x4, scoped, tag = 'scoped memory for tpu_custom_call.1']
    #allocation5 [shape = 'u8[1024]{0}', space=vmem, size = 0x400, scoped, tag = 'output window, operand 0, single buffered']
    %9 = vsyncpa [#allocation3], 0
    %10 = vsyncpa [#allocation4], 0
    // Predicated region
    $region2: #{tpu_custom_call.1} parent=1 // pred_check
      _
    $region3: #{tpu_custom_call.1} parent=1 // pred_check_branch
      %12 = sbr.rel (0) target = $region5
    $region4: #{tpu_custom_call.1} parent=1 // pred_region
      %s14 = ssub.s32 32, 32
      %15 = vsyncadd [#allocation3], %s14
      %s17 = sshll.u32 [#allocation2], 4
      %s18 = int_to_ptr.vmem [resolvable:$true] %s17
      %20 = dma.hbm_to_vmem [thread:$0]  %s0, 32, %s18, [#allocation3]
    $region5: #{tpu_custom_call.1} parent=1 // pred_fallthru
      _
    // Predicated region
    $region6: #{tpu_custom_call.1} parent=1 // pred_check
      _
    $region7: #{tpu_custom_call.1} parent=1 // pred_check_branch
      %22 = sbr.rel (0) target = $region9
    $region8: #{tpu_custom_call.1} parent=1 // pred_region
      _
    $region9: #{tpu_custom_call.1} parent=1 // pred_fallthru
      _
    // Predicated region
    $region10: #{tpu_custom_call.1} parent=1 // pred_check
      _
    $region11: #{tpu_custom_call.1} parent=1 // pred_check_branch
      %24 = sbr.rel (0) target = $region13
    $region12: #{tpu_custom_call.1} parent=1 // pred_region
      _
    $region13: #{tpu_custom_call.1} parent=1 // pred_fallthru
      _
    // Predicated region
    $region14: #{tpu_custom_call.1} parent=1 // pred_check
      _
    $region15: #{tpu_custom_call.1} parent=1 // pred_check_branch
      %26 = sbr.rel (0) target = $region17
    $region16: #{tpu_custom_call.1} parent=1 // pred_region
      _
    $region17: #{tpu_custom_call.1} parent=1 // pred_fallthru
      _
    // Predicated region
    $region18: #{tpu_custom_call.1} parent=1 // pred_check
      _
    $region19: #{tpu_custom_call.1} parent=1 // pred_check_branch
      %28 = sbr.rel (0) target = $region21
    $region20: #{tpu_custom_call.1} parent=1 // pred_region
      %29 = dma.done [#allocation3], 32
    $region21: #{tpu_custom_call.1} parent=1 // pred_fallthru
      _
    %v30 = vld [vmem:[%s2] sm:$0x1]
    %v31 = vld [vmem:[%s3] sm:$0x1]
    %v32 = vld [vmem:[#allocation2] sm:$0x3]
    %v34 = vlaneseq
    %v35 = vshrl.u32 %v34, 7
    %v36 = vsub.s32 0, %v35
    %v37 = vrot.slane %v31, %v36
    %v39 = vmul.f32 %v32, %v37
    %v40 = vld [vmem:[%s1] sm:$0x3]
    %v42 = vlaneseq
    %v43 = vshrl.u32 %v42, 7
    %v44 = vsub.s32 0, %v43
    %v45 = vrot.slane %v30, %v44
    %v47 = vmul.f32 %v40, %v45
    %v48 = vadd.f32 %v39, %v47
    %49 = vst [vmem:[#allocation5] sm:$0x3] %v48
    // Predicated region
    $region22: #{tpu_custom_call.1} parent=1 // pred_check
      _
    $region23: #{tpu_custom_call.1} parent=1 // pred_check_branch
      %51 = sbr.rel (0) target = $region25
    $region24: #{tpu_custom_call.1} parent=1 // pred_region
      %s53 = ssub.s32 32, 32
      %54 = vsyncadd [#allocation4], %s53
      %s56 = sshll.u32 [#allocation5], 4
      %s57 = int_to_ptr.vmem [resolvable:$true] %s56
      %59 = dma.vmem_to_hbm [thread:$0]  %s57, 32, %s4, [#allocation4]
    $region25: #{tpu_custom_call.1} parent=1 // pred_fallthru
      _
    // Predicated region
    $region26: #{tpu_custom_call.1} parent=1 // pred_check
      _
    $region27: #{tpu_custom_call.1} parent=1 // pred_check_branch
      %61 = sbr.rel (0) target = $region29
    $region28: #{tpu_custom_call.1} parent=1 // pred_region
      %62 = dma.done [#allocation4], 32
    $region29: #{tpu_custom_call.1} parent=1 // pred_fallthru
      _
    %63 = vsyncpa [#allocation3], 1
    %64 = vsyncpa [#allocation4], 1

</llo_original>
